<compile_context>
chip_gen: v6e
topology: v6e:2x2x1
jax: 0.10.0
libtpu: 0.0.40
codegen_flags: <defaults>
</compile_context>

<pallas_src>
import jax
import jax.numpy as jnp
from jax.experimental import pallas as pl
from jax.experimental.pallas import tpu as pltpu


def _make_conv_kernel(N, C_in, C_out, L, L_out, K, pad):
    KC = K * C_in

    def kernel(x_ref, w_ref, o_ref):
        # x_ref: (N, C_in, L)           full input slab, length on lanes
        # w_ref: (C_out, K*C_in + 1)    w[co, k*C_in+ci] = weight[co, ci, k]; last col = bias
        # o_ref: (N, C_out, L_out)
        w = w_ref[...]
        bias_col = w[:, KC:KC + 1]                                   # (C_out, 1)
        # Hoisted: broadcast_in_dim is not CSE'd by JAX, so do it once.
        bias_tile = jnp.broadcast_to(bias_col, (C_out, L_out)).astype(jnp.float32)

        for n in range(N):                                           # N=2, fully unrolled
            x = x_ref[n]                                             # (C_in, L)

            # K circularly-shifted taps, each at native problem width L.
            if L_out == L:                                           # odd K ("same" conv)
                taps = []
                for k in range(K):
                    s = (pad - k) % L                                # tap_k[j] = x[(j+k-pad) mod L]
                    if s == 0:
                        taps.append(x)
                    else:
                        taps.append(
                            jnp.concatenate([x[:, L - s:], x[:, :L - s]], axis=1))
            else:
                # General (even-K) fallback: explicit circular pad + slice.
                xp = jnp.concatenate([x[:, L - pad:], x, x[:, :pad]], axis=1) if pad else x
                taps = [xp[:, k:k + L_out] for k in range(K)]

            # Accumulator starts as the broadcast bias (saves a full-tile add).
            acc = bias_tile
            # K*C_in unrolled VPU FMAs: (C_out,1) column x (1,L_out) shifted tap.
            for k in range(K):
                for ci in range(C_in):
                    j = k * C_in + ci
                    col = w[:, j:j + 1]                              # (C_out, 1)
                    row = taps[k][ci:ci + 1, :]                      # (1, L_out)
                    acc = acc + col * row

            o_ref[n] = acc.astype(o_ref.dtype)

    return kernel


def wrapped_conv1d(x_ncl, weight, bias):
    """Circular-pad then Conv1d, matching the PyTorch WrappedConv1d forward.

    x_ncl:  (N, C_in, L)       float32 (NCL, PyTorch layout)
    weight: (C_out, C_in, K)   float32 (PyTorch Conv1d layout)
    bias:   (C_out,)           float32
    returns (N, C_out, L_out) with L_out = L + 2*((K-1)//2) - K + 1
    """
    N, C_in, L = x_ncl.shape
    C_out, _, K = weight.shape
    pad = (K - 1) // 2
    L_out = L + 2 * pad - K + 1

    # Tiny weight prep (C_out*(C_in*K + 1) = 104 scalars): fold bias into the
    # weight block so the kernel has only 2 operands (2 DMAs, 2 buffer pairs).
    w2 = jnp.transpose(weight, (0, 2, 1)).reshape(C_out, K * C_in)   # [co, k*C_in+ci]
    w_packed = jnp.concatenate([w2, bias.reshape(C_out, 1)], axis=1)  # (C_out, K*C_in+1)

    # No grid: one invocation, whole arrays resident in VMEM (total ~1 KiB —
    # far under every generation's VMEM limit, no vmem_limit_bytes needed).
    return pl.pallas_call(
        _make_conv_kernel(N, C_in, C_out, L, L_out, K, pad),
        out_shape=jax.ShapeDtypeStruct((N, C_out, L_out), x_ncl.dtype),
        in_specs=[
            pl.BlockSpec(memory_space=pltpu.MemorySpace.VMEM),   # x, full slab
            pl.BlockSpec(memory_space=pltpu.MemorySpace.VMEM),   # packed weights+bias
        ],
        out_specs=pl.BlockSpec(memory_space=pltpu.MemorySpace.VMEM),
    )(x_ncl, w_packed)


def _reference(x_ncl, weight, bias):
    """Pure-JAX reference of the same forward pass (for sanity check)."""
    C_out, C_in, K = weight.shape
    pad = (K - 1) // 2
    x_pad = jnp.pad(x_ncl, ((0, 0), (0, 0), (pad, pad)), mode="wrap")
    L_out = x_pad.shape[-1] - K + 1
    taps = jnp.stack([x_pad[:, :, k:k + L_out] for k in range(K)], axis=-1)  # (N,C_in,L_out,K)
    return jnp.einsum("nclk,ock->nol", taps, weight) + bias[None, :, None]


if __name__ == "__main__":
    # Module config: WrappedConv1d(in_channels=4, out_channels=8, kernel_size=3)
    N, C_in, C_out, L, K = 2, 4, 8, 16, 3

    key = jax.random.PRNGKey(0)
    kx, kw, kb = jax.random.split(key, 3)

    x = jax.random.normal(kx, (N, C_in, L), dtype=jnp.float32)

    # Deterministic PyTorch-style init: U(-bound, bound), bound = 1/sqrt(C_in*K)
    bound = float(1.0 / (C_in * K) ** 0.5)
    weight = jax.random.uniform(kw, (C_out, C_in, K), jnp.float32, -bound, bound)
    bias = jax.random.uniform(kb, (C_out,), jnp.float32, -bound, bound)

    out = jax.block_until_ready(wrapped_conv1d(x, weight, bias))

    ref = _reference(x, weight, bias)
    assert out.shape == ref.shape, (out.shape, ref.shape)
    assert jnp.allclose(out, ref, atol=1e-5, rtol=1e-5), float(jnp.max(jnp.abs(out - ref)))

    print("KERNEL_OK")
</pallas_src>

<mosaic_0001>
module attributes {stable_mosaic.version = 11 : i64} {
  func.func @kernel(%arg0: memref<2x4x16xf32, #tpu.memory_space<vmem>>, %arg1: memref<8x13xf32, #tpu.memory_space<vmem>>, %arg2: memref<2x8x16xf32, #tpu.memory_space<vmem>>) attributes {dimension_semantics = [], scalar_prefetch = 0 : i64, scratch_operands = 0 : i64, tpu.core_type = #tpu.core_type<tc>} {
    %c0 = arith.constant 0 : index
    %c0_0 = arith.constant 0 : index
    %0 = vector.load %arg1[%c0, %c0_0] : memref<8x13xf32, #tpu.memory_space<vmem>>, vector<8x13xf32>
    %1 = vector.extract_strided_slice %0 {offsets = [0, 12], sizes = [8, 1], strides = [1, 1]} : vector<8x13xf32> to vector<8x1xf32>
    %2 = vector.shape_cast %1 : vector<8x1xf32> to vector<8x1xf32>
    %3 = vector.broadcast %2 : vector<8x1xf32> to vector<8x16xf32>
    %c0_1 = arith.constant 0 : index
    %c0_2 = arith.constant 0 : index
    %c0_3 = arith.constant 0 : index
    %4 = vector.load %arg0[%c0_1, %c0_2, %c0_3] : memref<2x4x16xf32, #tpu.memory_space<vmem>>, vector<1x4x16xf32>
    %5 = vector.shape_cast %4 : vector<1x4x16xf32> to vector<4x16xf32>
    %6 = vector.extract_strided_slice %5 {offsets = [0, 15], sizes = [4, 1], strides = [1, 1]} : vector<4x16xf32> to vector<4x1xf32>
    %7 = vector.extract_strided_slice %5 {offsets = [0, 0], sizes = [4, 15], strides = [1, 1]} : vector<4x16xf32> to vector<4x15xf32>
    %8 = tpu.concatenate %6, %7 in 1 : vector<4x1xf32>, vector<4x15xf32> -> vector<4x16xf32>
    %9 = vector.extract_strided_slice %5 {offsets = [0, 1], sizes = [4, 15], strides = [1, 1]} : vector<4x16xf32> to vector<4x15xf32>
    %10 = vector.extract_strided_slice %5 {offsets = [0, 0], sizes = [4, 1], strides = [1, 1]} : vector<4x16xf32> to vector<4x1xf32>
    %11 = tpu.concatenate %9, %10 in 1 : vector<4x15xf32>, vector<4x1xf32> -> vector<4x16xf32>
    %12 = vector.extract_strided_slice %0 {offsets = [0, 0], sizes = [8, 1], strides = [1, 1]} : vector<8x13xf32> to vector<8x1xf32>
    %13 = vector.extract_strided_slice %8 {offsets = [0, 0], sizes = [1, 16], strides = [1, 1]} : vector<4x16xf32> to vector<1x16xf32>
    %14 = vector.broadcast %12 : vector<8x1xf32> to vector<8x16xf32>
    %15 = vector.broadcast %13 : vector<1x16xf32> to vector<8x16xf32>
    %16 = arith.mulf %14, %15 : vector<8x16xf32>
    %17 = arith.addf %3, %16 : vector<8x16xf32>
    %18 = vector.extract_strided_slice %0 {offsets = [0, 1], sizes = [8, 1], strides = [1, 1]} : vector<8x13xf32> to vector<8x1xf32>
    %19 = vector.extract_strided_slice %8 {offsets = [1, 0], sizes = [1, 16], strides = [1, 1]} : vector<4x16xf32> to vector<1x16xf32>
    %20 = vector.broadcast %18 : vector<8x1xf32> to vector<8x16xf32>
    %21 = vector.broadcast %19 : vector<1x16xf32> to vector<8x16xf32>
    %22 = arith.mulf %20, %21 : vector<8x16xf32>
    %23 = arith.addf %17, %22 : vector<8x16xf32>
    %24 = vector.extract_strided_slice %0 {offsets = [0, 2], sizes = [8, 1], strides = [1, 1]} : vector<8x13xf32> to vector<8x1xf32>
    %25 = vector.extract_strided_slice %8 {offsets = [2, 0], sizes = [1, 16], strides = [1, 1]} : vector<4x16xf32> to vector<1x16xf32>
    %26 = vector.broadcast %24 : vector<8x1xf32> to vector<8x16xf32>
    %27 = vector.broadcast %25 : vector<1x16xf32> to vector<8x16xf32>
    %28 = arith.mulf %26, %27 : vector<8x16xf32>
    %29 = arith.addf %23, %28 : vector<8x16xf32>
    %30 = vector.extract_strided_slice %0 {offsets = [0, 3], sizes = [8, 1], strides = [1, 1]} : vector<8x13xf32> to vector<8x1xf32>
    %31 = vector.extract_strided_slice %8 {offsets = [3, 0], sizes = [1, 16], strides = [1, 1]} : vector<4x16xf32> to vector<1x16xf32>
    %32 = vector.broadcast %30 : vector<8x1xf32> to vector<8x16xf32>
    %33 = vector.broadcast %31 : vector<1x16xf32> to vector<8x16xf32>
    %34 = arith.mulf %32, %33 : vector<8x16xf32>
    %35 = arith.addf %29, %34 : vector<8x16xf32>
    %36 = vector.extract_strided_slice %0 {offsets = [0, 4], sizes = [8, 1], strides = [1, 1]} : vector<8x13xf32> to vector<8x1xf32>
    %37 = vector.extract_strided_slice %5 {offsets = [0, 0], sizes = [1, 16], strides = [1, 1]} : vector<4x16xf32> to vector<1x16xf32>
    %38 = vector.broadcast %36 : vector<8x1xf32> to vector<8x16xf32>
    %39 = vector.broadcast %37 : vector<1x16xf32> to vector<8x16xf32>
    %40 = arith.mulf %38, %39 : vector<8x16xf32>
    %41 = arith.addf %35, %40 : vector<8x16xf32>
    %42 = vector.extract_strided_slice %0 {offsets = [0, 5], sizes = [8, 1], strides = [1, 1]} : vector<8x13xf32> to vector<8x1xf32>
    %43 = vector.extract_strided_slice %5 {offsets = [1, 0], sizes = [1, 16], strides = [1, 1]} : vector<4x16xf32> to vector<1x16xf32>
    %44 = vector.broadcast %42 : vector<8x1xf32> to vector<8x16xf32>
    %45 = vector.broadcast %43 : vector<1x16xf32> to vector<8x16xf32>
    %46 = arith.mulf %44, %45 : vector<8x16xf32>
    %47 = arith.addf %41, %46 : vector<8x16xf32>
    %48 = vector.extract_strided_slice %0 {offsets = [0, 6], sizes = [8, 1], strides = [1, 1]} : vector<8x13xf32> to vector<8x1xf32>
    %49 = vector.extract_strided_slice %5 {offsets = [2, 0], sizes = [1, 16], strides = [1, 1]} : vector<4x16xf32> to vector<1x16xf32>
    %50 = vector.broadcast %48 : vector<8x1xf32> to vector<8x16xf32>
    %51 = vector.broadcast %49 : vector<1x16xf32> to vector<8x16xf32>
    %52 = arith.mulf %50, %51 : vector<8x16xf32>
    %53 = arith.addf %47, %52 : vector<8x16xf32>
    %54 = vector.extract_strided_slice %0 {offsets = [0, 7], sizes = [8, 1], strides = [1, 1]} : vector<8x13xf32> to vector<8x1xf32>
    %55 = vector.extract_strided_slice %5 {offsets = [3, 0], sizes = [1, 16], strides = [1, 1]} : vector<4x16xf32> to vector<1x16xf32>
    %56 = vector.broadcast %54 : vector<8x1xf32> to vector<8x16xf32>
    %57 = vector.broadcast %55 : vector<1x16xf32> to vector<8x16xf32>
    %58 = arith.mulf %56, %57 : vector<8x16xf32>
    %59 = arith.addf %53, %58 : vector<8x16xf32>
    %60 = vector.extract_strided_slice %0 {offsets = [0, 8], sizes = [8, 1], strides = [1, 1]} : vector<8x13xf32> to vector<8x1xf32>
    %61 = vector.extract_strided_slice %11 {offsets = [0, 0], sizes = [1, 16], strides = [1, 1]} : vector<4x16xf32> to vector<1x16xf32>
    %62 = vector.broadcast %60 : vector<8x1xf32> to vector<8x16xf32>
    %63 = vector.broadcast %61 : vector<1x16xf32> to vector<8x16xf32>
    %64 = arith.mulf %62, %63 : vector<8x16xf32>
    %65 = arith.addf %59, %64 : vector<8x16xf32>
    %66 = vector.extract_strided_slice %0 {offsets = [0, 9], sizes = [8, 1], strides = [1, 1]} : vector<8x13xf32> to vector<8x1xf32>
    %67 = vector.extract_strided_slice %11 {offsets = [1, 0], sizes = [1, 16], strides = [1, 1]} : vector<4x16xf32> to vector<1x16xf32>
    %68 = vector.broadcast %66 : vector<8x1xf32> to vector<8x16xf32>
    %69 = vector.broadcast %67 : vector<1x16xf32> to vector<8x16xf32>
    %70 = arith.mulf %68, %69 : vector<8x16xf32>
    %71 = arith.addf %65, %70 : vector<8x16xf32>
    %72 = vector.extract_strided_slice %0 {offsets = [0, 10], sizes = [8, 1], strides = [1, 1]} : vector<8x13xf32> to vector<8x1xf32>
    %73 = vector.extract_strided_slice %11 {offsets = [2, 0], sizes = [1, 16], strides = [1, 1]} : vector<4x16xf32> to vector<1x16xf32>
    %74 = vector.broadcast %72 : vector<8x1xf32> to vector<8x16xf32>
    %75 = vector.broadcast %73 : vector<1x16xf32> to vector<8x16xf32>
    %76 = arith.mulf %74, %75 : vector<8x16xf32>
    %77 = arith.addf %71, %76 : vector<8x16xf32>
    %78 = vector.extract_strided_slice %0 {offsets = [0, 11], sizes = [8, 1], strides = [1, 1]} : vector<8x13xf32> to vector<8x1xf32>
    %79 = vector.extract_strided_slice %11 {offsets = [3, 0], sizes = [1, 16], strides = [1, 1]} : vector<4x16xf32> to vector<1x16xf32>
    %80 = vector.broadcast %78 : vector<8x1xf32> to vector<8x16xf32>
    %81 = vector.broadcast %79 : vector<1x16xf32> to vector<8x16xf32>
    %82 = arith.mulf %80, %81 : vector<8x16xf32>
    %83 = arith.addf %77, %82 : vector<8x16xf32>
    %c0_4 = arith.constant 0 : index
    %c0_5 = arith.constant 0 : index
    %c0_6 = arith.constant 0 : index
    %84 = vector.load %arg2[%c0_4, %c0_5, %c0_6] : memref<2x8x16xf32, #tpu.memory_space<vmem>>, vector<1x8x16xf32>
    %85 = vector.shape_cast %84 : vector<1x8x16xf32> to vector<8x16xf32>
    %86 = vector.shape_cast %83 : vector<8x16xf32> to vector<1x8x16xf32>
    tpu.vector_store %arg2[%c0_4, %c0_5, %c0_6], %86 {strides = array<i32>} : memref<2x8x16xf32, #tpu.memory_space<vmem>>, vector<1x8x16xf32>,
    %c1 = arith.constant 1 : index
    %c0_7 = arith.constant 0 : index
    %c0_8 = arith.constant 0 : index
    %87 = vector.load %arg0[%c1, %c0_7, %c0_8] : memref<2x4x16xf32, #tpu.memory_space<vmem>>, vector<1x4x16xf32>
    %88 = vector.shape_cast %87 : vector<1x4x16xf32> to vector<4x16xf32>
    %89 = vector.extract_strided_slice %88 {offsets = [0, 15], sizes = [4, 1], strides = [1, 1]} : vector<4x16xf32> to vector<4x1xf32>
    %90 = vector.extract_strided_slice %88 {offsets = [0, 0], sizes = [4, 15], strides = [1, 1]} : vector<4x16xf32> to vector<4x15xf32>
    %91 = tpu.concatenate %89, %90 in 1 : vector<4x1xf32>, vector<4x15xf32> -> vector<4x16xf32>
    %92 = vector.extract_strided_slice %88 {offsets = [0, 1], sizes = [4, 15], strides = [1, 1]} : vector<4x16xf32> to vector<4x15xf32>
    %93 = vector.extract_strided_slice %88 {offsets = [0, 0], sizes = [4, 1], strides = [1, 1]} : vector<4x16xf32> to vector<4x1xf32>
    %94 = tpu.concatenate %92, %93 in 1 : vector<4x15xf32>, vector<4x1xf32> -> vector<4x16xf32>
    %95 = vector.extract_strided_slice %0 {offsets = [0, 0], sizes = [8, 1], strides = [1, 1]} : vector<8x13xf32> to vector<8x1xf32>
    %96 = vector.extract_strided_slice %91 {offsets = [0, 0], sizes = [1, 16], strides = [1, 1]} : vector<4x16xf32> to vector<1x16xf32>
    %97 = vector.broadcast %95 : vector<8x1xf32> to vector<8x16xf32>
    %98 = vector.broadcast %96 : vector<1x16xf32> to vector<8x16xf32>
    %99 = arith.mulf %97, %98 : vector<8x16xf32>
    %100 = arith.addf %3, %99 : vector<8x16xf32>
    %101 = vector.extract_strided_slice %0 {offsets = [0, 1], sizes = [8, 1], strides = [1, 1]} : vector<8x13xf32> to vector<8x1xf32>
    %102 = vector.extract_strided_slice %91 {offsets = [1, 0], sizes = [1, 16], strides = [1, 1]} : vector<4x16xf32> to vector<1x16xf32>
    %103 = vector.broadcast %101 : vector<8x1xf32> to vector<8x16xf32>
    %104 = vector.broadcast %102 : vector<1x16xf32> to vector<8x16xf32>
    %105 = arith.mulf %103, %104 : vector<8x16xf32>
    %106 = arith.addf %100, %105 : vector<8x16xf32>
    %107 = vector.extract_strided_slice %0 {offsets = [0, 2], sizes = [8, 1], strides = [1, 1]} : vector<8x13xf32> to vector<8x1xf32>
    %108 = vector.extract_strided_slice %91 {offsets = [2, 0], sizes = [1, 16], strides = [1, 1]} : vector<4x16xf32> to vector<1x16xf32>
    %109 = vector.broadcast %107 : vector<8x1xf32> to vector<8x16xf32>
    %110 = vector.broadcast %108 : vector<1x16xf32> to vector<8x16xf32>
    %111 = arith.mulf %109, %110 : vector<8x16xf32>
    %112 = arith.addf %106, %111 : vector<8x16xf32>
    %113 = vector.extract_strided_slice %0 {offsets = [0, 3], sizes = [8, 1], strides = [1, 1]} : vector<8x13xf32> to vector<8x1xf32>
    %114 = vector.extract_strided_slice %91 {offsets = [3, 0], sizes = [1, 16], strides = [1, 1]} : vector<4x16xf32> to vector<1x16xf32>
    %115 = vector.broadcast %113 : vector<8x1xf32> to vector<8x16xf32>
    %116 = vector.broadcast %114 : vector<1x16xf32> to vector<8x16xf32>
    %117 = arith.mulf %115, %116 : vector<8x16xf32>
    %118 = arith.addf %112, %117 : vector<8x16xf32>
    %119 = vector.extract_strided_slice %0 {offsets = [0, 4], sizes = [8, 1], strides = [1, 1]} : vector<8x13xf32> to vector<8x1xf32>
    %120 = vector.extract_strided_slice %88 {offsets = [0, 0], sizes = [1, 16], strides = [1, 1]} : vector<4x16xf32> to vector<1x16xf32>
    %121 = vector.broadcast %119 : vector<8x1xf32> to vector<8x16xf32>
    %122 = vector.broadcast %120 : vector<1x16xf32> to vector<8x16xf32>
    %123 = arith.mulf %121, %122 : vector<8x16xf32>
    %124 = arith.addf %118, %123 : vector<8x16xf32>
    %125 = vector.extract_strided_slice %0 {offsets = [0, 5], sizes = [8, 1], strides = [1, 1]} : vector<8x13xf32> to vector<8x1xf32>
    %126 = vector.extract_strided_slice %88 {offsets = [1, 0], sizes = [1, 16], strides = [1, 1]} : vector<4x16xf32> to vector<1x16xf32>
    %127 = vector.broadcast %125 : vector<8x1xf32> to vector<8x16xf32>
    %128 = vector.broadcast %126 : vector<1x16xf32> to vector<8x16xf32>
    %129 = arith.mulf %127, %128 : vector<8x16xf32>
    %130 = arith.addf %124, %129 : vector<8x16xf32>
    %131 = vector.extract_strided_slice %0 {offsets = [0, 6], sizes = [8, 1], strides = [1, 1]} : vector<8x13xf32> to vector<8x1xf32>
    %132 = vector.extract_strided_slice %88 {offsets = [2, 0], sizes = [1, 16], strides = [1, 1]} : vector<4x16xf32> to vector<1x16xf32>
    %133 = vector.broadcast %131 : vector<8x1xf32> to vector<8x16xf32>
    %134 = vector.broadcast %132 : vector<1x16xf32> to vector<8x16xf32>
    %135 = arith.mulf %133, %134 : vector<8x16xf32>
    %136 = arith.addf %130, %135 : vector<8x16xf32>
    %137 = vector.extract_strided_slice %0 {offsets = [0, 7], sizes = [8, 1], strides = [1, 1]} : vector<8x13xf32> to vector<8x1xf32>
    %138 = vector.extract_strided_slice %88 {offsets = [3, 0], sizes = [1, 16], strides = [1, 1]} : vector<4x16xf32> to vector<1x16xf32>
    %139 = vector.broadcast %137 : vector<8x1xf32> to vector<8x16xf32>
    %140 = vector.broadcast %138 : vector<1x16xf32> to vector<8x16xf32>
    %141 = arith.mulf %139, %140 : vector<8x16xf32>
    %142 = arith.addf %136, %141 : vector<8x16xf32>
    %143 = vector.extract_strided_slice %0 {offsets = [0, 8], sizes = [8, 1], strides = [1, 1]} : vector<8x13xf32> to vector<8x1xf32>
    %144 = vector.extract_strided_slice %94 {offsets = [0, 0], sizes = [1, 16], strides = [1, 1]} : vector<4x16xf32> to vector<1x16xf32>
    %145 = vector.broadcast %143 : vector<8x1xf32> to vector<8x16xf32>
    %146 = vector.broadcast %144 : vector<1x16xf32> to vector<8x16xf32>
    %147 = arith.mulf %145, %146 : vector<8x16xf32>
    %148 = arith.addf %142, %147 : vector<8x16xf32>
    %149 = vector.extract_strided_slice %0 {offsets = [0, 9], sizes = [8, 1], strides = [1, 1]} : vector<8x13xf32> to vector<8x1xf32>
    %150 = vector.extract_strided_slice %94 {offsets = [1, 0], sizes = [1, 16], strides = [1, 1]} : vector<4x16xf32> to vector<1x16xf32>
    %151 = vector.broadcast %149 : vector<8x1xf32> to vector<8x16xf32>
    %152 = vector.broadcast %150 : vector<1x16xf32> to vector<8x16xf32>
    %153 = arith.mulf %151, %152 : vector<8x16xf32>
    %154 = arith.addf %148, %153 : vector<8x16xf32>
    %155 = vector.extract_strided_slice %0 {offsets = [0, 10], sizes = [8, 1], strides = [1, 1]} : vector<8x13xf32> to vector<8x1xf32>
    %156 = vector.extract_strided_slice %94 {offsets = [2, 0], sizes = [1, 16], strides = [1, 1]} : vector<4x16xf32> to vector<1x16xf32>
    %157 = vector.broadcast %155 : vector<8x1xf32> to vector<8x16xf32>
    %158 = vector.broadcast %156 : vector<1x16xf32> to vector<8x16xf32>
    %159 = arith.mulf %157, %158 : vector<8x16xf32>
    %160 = arith.addf %154, %159 : vector<8x16xf32>
    %161 = vector.extract_strided_slice %0 {offsets = [0, 11], sizes = [8, 1], strides = [1, 1]} : vector<8x13xf32> to vector<8x1xf32>
    %162 = vector.extract_strided_slice %94 {offsets = [3, 0], sizes = [1, 16], strides = [1, 1]} : vector<4x16xf32> to vector<1x16xf32>
    %163 = vector.broadcast %161 : vector<8x1xf32> to vector<8x16xf32>
    %164 = vector.broadcast %162 : vector<1x16xf32> to vector<8x16xf32>
    %165 = arith.mulf %163, %164 : vector<8x16xf32>
    %166 = arith.addf %160, %165 : vector<8x16xf32>
    %c1_9 = arith.constant 1 : index
    %c0_10 = arith.constant 0 : index
    %c0_11 = arith.constant 0 : index
    %167 = vector.load %arg2[%c1_9, %c0_10, %c0_11] : memref<2x8x16xf32, #tpu.memory_space<vmem>>, vector<1x8x16xf32>
    %168 = vector.shape_cast %167 : vector<1x8x16xf32> to vector<8x16xf32>
    %169 = vector.shape_cast %166 : vector<8x16xf32> to vector<1x8x16xf32>
    tpu.vector_store %arg2[%c1_9, %c0_10, %c0_11], %169 {strides = array<i32>} : memref<2x8x16xf32, #tpu.memory_space<vmem>>, vector<1x8x16xf32>,
    return
  }
}

</mosaic_0001>

<llo_original>
// kernel: tpu_custom_call.1
$region0: #{tpu_custom_call.1}
  #allocation0 [shape = 'u32[]', space=smem, size = 0x4, offset = 0x4, fixed_abs, tag = 'smem constant byte address 0x4 - core index']
  #allocation1 [shape = 'u32[144,128]{1,0:T(1,128)}', space=vmem, size = 0x12000, scoped, tag = 'internal scratch']
  %s0 = inlined_call_operand.hbm [shape: f32[2,4,16], index: 0, kind: input, shape index: {}]
  %s1 = inlined_call_operand.hbm [shape: f32[8,13], index: 1, kind: input, shape index: {}]
  %s2 = inlined_call_operand.hbm [shape: f32[2,8,16], index: 2, kind: output, shape index: {}]
  %s3 = sld [smem:[#allocation0]]
  $region26: #{tpu_custom_call.1} parent=0
    _
  %s5 = ssub.s32 1, %s3
  %s6 = scalar_select 0, %s5, %s3
  $region1: #{tpu_custom_call.1} parent=0
    #allocation2 [shape = 'u8[4096]{0}', space=vmem, size = 0x1000, scoped, tag = 'input window, operand 0, single buffered']
    #allocation3 [shape = 's32[1]{0}', space=sflag, size = 0x4, scoped, tag = 'scoped memory for tpu_custom_call.1']
    #allocation4 [shape = 's32[1]{0}', space=sflag, size = 0x4, scoped, tag = 'scoped memory for tpu_custom_call.1']
    #allocation5 [shape = 'u8[4096]{0}', space=vmem, size = 0x1000, scoped, tag = 'input window, operand 1, single buffered']
    #allocation6 [shape = 's32[1]{0}', space=sflag, size = 0x4, scoped, tag = 'scoped memory for tpu_custom_call.1']
    #allocation7 [shape = 'u8[8192]{0}', space=vmem, size = 0x2000, scoped, tag = 'output window, operand 0, single buffered']
    %7 = vsyncpa [#allocation3], 0
    %8 = vsyncpa [#allocation6], 0
    %9 = vsyncpa [#allocation4], 0
    // Predicated region
    $region2: #{tpu_custom_call.1} parent=1 // pred_check
      _
    $region3: #{tpu_custom_call.1} parent=1 // pred_check_branch
      %11 = sbr.rel (0) target = $region5
    $region4: #{tpu_custom_call.1} parent=1 // pred_region
      %s13 = ssub.s32 128, 128
      %14 = vsyncadd [#allocation3], %s13
      %s15 = sshll.u32 [#allocation2], 4
      %s16 = int_to_ptr.vmem [resolvable:$true] %s15
      %21 = dma.hbm_to_vmem [thread:$0]  %s0, 128, %s16, [#allocation3], 64, 64, 4
    $region5: #{tpu_custom_call.1} parent=1 // pred_fallthru
      _
    // Predicated region
    $region6: #{tpu_custom_call.1} parent=1 // pred_check
      _
    $region7: #{tpu_custom_call.1} parent=1 // pred_check_branch
      %23 = sbr.rel (0) target = $region9
    $region8: #{tpu_custom_call.1} parent=1 // pred_region
      %s25 = ssub.s32 128, 128
      %26 = vsyncadd [#allocation6], %s25
      %s28 = sshll.u32 [#allocation5], 4
      %s29 = int_to_ptr.vmem [resolvable:$true] %s28
      %31 = dma.hbm_to_vmem [thread:$0]  %s1, 128, %s29, [#allocation6]
    $region9: #{tpu_custom_call.1} parent=1 // pred_fallthru
      _
    // Predicated region
    $region10: #{tpu_custom_call.1} parent=1 // pred_check
      _
    $region11: #{tpu_custom_call.1} parent=1 // pred_check_branch
      %33 = sbr.rel (0) target = $region13
    $region12: #{tpu_custom_call.1} parent=1 // pred_region
      %34 = dma.done [#allocation3], 128
    $region13: #{tpu_custom_call.1} parent=1 // pred_fallthru
      _
    // Predicated region
    $region14: #{tpu_custom_call.1} parent=1 // pred_check
      _
    $region15: #{tpu_custom_call.1} parent=1 // pred_check_branch
      %36 = sbr.rel (0) target = $region17
    $region16: #{tpu_custom_call.1} parent=1 // pred_region
      %37 = dma.done [#allocation6], 128
    $region17: #{tpu_custom_call.1} parent=1 // pred_fallthru
      _
    %v38 = vld [vmem:[#allocation5] sm:$0xff]
    %40 = vset.pattern.permute.xlu0 12
    %41 = vperm.xlu0 %40, %v38
    %v42 = vpop.permute.xlu0 %41
    %v44 = vld [vmem:[#allocation2] sm:$0xf]
    %46 = vrot.lane.b32.xlu0 %v44, 113
    %v47 = vpop.permute.xlu0 %46
    %49 = vrot.lane.b32.xlu0 %v44, 1
    %v50 = vpop.permute.xlu0 %49
    %vm52 = vcmask 7168
    %v53 = vsel %vm52, %v47, %v50
    %54 = vrot.lane.b32.xlu0 %v44, 127
    %v55 = vpop.permute.xlu0 %54
    %57 = vrot.lane.b32.xlu0 %v44, 15
    %v58 = vpop.permute.xlu0 %57
    %vm60 = vcmask 121856
    %v61 = vsel %vm60, %v55, %v58
    %62 = vset.pattern.permute.xlu0 0
    %63 = vperm.xlu0 %62, %v38
    %v64 = vpop.permute.xlu0 %63
    %v66 = vlaneseq
    %v67 = vshrl.u32 %v66, 7
    %v68 = vsub.s32 0, %v67
    %v69 = vrot.slane %v53, %v68
    %v70 = vmul.f32 %v64, %v69
    %v71 = vadd.f32 %v42, %v70
    %72 = vset.pattern.permute.xlu0 1
    %73 = vperm.xlu0 %72, %v38
    %v74 = vpop.permute.xlu0 %73
    %v76 = vlaneseq
    %v77 = vshrl.u32 %v76, 7
    %v78 = vsub.s32 1, %v77
    %v79 = vrot.slane %v53, %v78
    %v80 = vmul.f32 %v74, %v79
    %v81 = vadd.f32 %v71, %v80
    %82 = vset.pattern.permute.xlu0 2
    %83 = vperm.xlu0 %82, %v38
    %v84 = vpop.permute.xlu0 %83
    %v86 = vlaneseq
    %v87 = vshrl.u32 %v86, 7
    %v88 = vsub.s32 2, %v87
    %v89 = vrot.slane %v53, %v88
    %v90 = vmul.f32 %v84, %v89
    %v91 = vadd.f32 %v81, %v90
    %92 = vset.pattern.permute.xlu0 3
    %93 = vperm.xlu0 %92, %v38
    %v94 = vpop.permute.xlu0 %93
    %v96 = vlaneseq
    %v97 = vshrl.u32 %v96, 7
    %v98 = vsub.s32 3, %v97
    %v99 = vrot.slane %v53, %v98
    %v100 = vmul.f32 %v94, %v99
    %v101 = vadd.f32 %v91, %v100
    %102 = vset.pattern.permute.xlu0 4
    %103 = vperm.xlu0 %102, %v38
    %v104 = vpop.permute.xlu0 %103
    %v106 = vlaneseq
    %v107 = vshrl.u32 %v106, 7
    %v108 = vsub.s32 0, %v107
    %v109 = vrot.slane %v44, %v108
    %v110 = vmul.f32 %v104, %v109
    %v111 = vadd.f32 %v101, %v110
    %112 = vset.pattern.permute.xlu0 5
    %113 = vperm.xlu0 %112, %v38
    %v114 = vpop.permute.xlu0 %113
    %v116 = vlaneseq
    %v117 = vshrl.u32 %v116, 7
    %v118 = vsub.s32 1, %v117
    %v119 = vrot.slane %v44, %v118
    %v120 = vmul.f32 %v114, %v119
    %v121 = vadd.f32 %v111, %v120
    %122 = vset.pattern.permute.xlu0 6
    %123 = vperm.xlu0 %122, %v38
    %v124 = vpop.permute.xlu0 %123
    %v126 = vlaneseq
    %v127 = vshrl.u32 %v126, 7
    %v128 = vsub.s32 2, %v127
    %v129 = vrot.slane %v44, %v128
    %v130 = vmul.f32 %v124, %v129
    %v131 = vadd.f32 %v121, %v130
    %132 = vset.pattern.permute.xlu0 7
    %133 = vperm.xlu0 %132, %v38
    %v134 = vpop.permute.xlu0 %133
    %v136 = vlaneseq
    %v137 = vshrl.u32 %v136, 7
    %v138 = vsub.s32 3, %v137
    %v139 = vrot.slane %v44, %v138
    %v140 = vmul.f32 %v134, %v139
    %v141 = vadd.f32 %v131, %v140
    %142 = vset.pattern.permute.xlu0 8
    %143 = vperm.xlu0 %142, %v38
    %v144 = vpop.permute.xlu0 %143
    %v146 = vlaneseq
    %v147 = vshrl.u32 %v146, 7
    %v148 = vsub.s32 0, %v147
    %v149 = vrot.slane %v61, %v148
    %v150 = vmul.f32 %v144, %v149
    %v151 = vadd.f32 %v141, %v150
    %152 = vset.pattern.permute.xlu0 9
    %153 = vperm.xlu0 %152, %v38
    %v154 = vpop.permute.xlu0 %153
    %v156 = vlaneseq
    %v157 = vshrl.u32 %v156, 7
    %v158 = vsub.s32 1, %v157
    %v159 = vrot.slane %v61, %v158
    %v160 = vmul.f32 %v154, %v159
    %v161 = vadd.f32 %v151, %v160
    %162 = vset.pattern.permute.xlu0 10
    %163 = vperm.xlu0 %162, %v38
    %v164 = vpop.permute.xlu0 %163
    %v166 = vlaneseq
    %v167 = vshrl.u32 %v166, 7
    %v168 = vsub.s32 2, %v167
    %v169 = vrot.slane %v61, %v168
    %v170 = vmul.f32 %v164, %v169
    %v171 = vadd.f32 %v161, %v170
    %172 = vset.pattern.permute.xlu0 11
    %173 = vperm.xlu0 %172, %v38
    %v174 = vpop.permute.xlu0 %173
    %v176 = vlaneseq
    %v177 = vshrl.u32 %v176, 7
    %v178 = vsub.s32 3, %v177
    %v179 = vrot.slane %v61, %v178
    %v180 = vmul.f32 %v174, %v179
    %v181 = vadd.f32 %v171, %v180
    %vm182 = vcmask 130048
    %183 = vst.msk [vmem:[#allocation7] sm:$0xff] %vm182, %v181
    %s184 = scalar_lea.vmem [#allocation2], 4
    %v185 = vld [vmem:[%s184] sm:$0xf]
    %187 = vrot.lane.b32.xlu0 %v185, 113
    %v188 = vpop.permute.xlu0 %187
    %190 = vrot.lane.b32.xlu0 %v185, 1
    %v191 = vpop.permute.xlu0 %190
    %v193 = vsel %vm52, %v188, %v191
    %194 = vrot.lane.b32.xlu0 %v185, 127
    %v195 = vpop.permute.xlu0 %194
    %197 = vrot.lane.b32.xlu0 %v185, 15
    %v198 = vpop.permute.xlu0 %197
    %v200 = vsel %vm60, %v195, %v198
    %v201 = vlaneseq
    %v202 = vshrl.u32 %v201, 7
    %v203 = vsub.s32 0, %v202
    %v204 = vrot.slane %v193, %v203
    %v205 = vmul.f32 %v64, %v204
    %v206 = vadd.f32 %v42, %v205
    %v207 = vlaneseq
    %v208 = vshrl.u32 %v207, 7
    %v209 = vsub.s32 1, %v208
    %v210 = vrot.slane %v193, %v209
    %v211 = vmul.f32 %v74, %v210
    %v212 = vadd.f32 %v206, %v211
    %v213 = vlaneseq
    %v214 = vshrl.u32 %v213, 7
    %v215 = vsub.s32 2, %v214
    %v216 = vrot.slane %v193, %v215
    %v217 = vmul.f32 %v84, %v216
    %v218 = vadd.f32 %v212, %v217
    %v219 = vlaneseq
    %v220 = vshrl.u32 %v219, 7
    %v221 = vsub.s32 3, %v220
    %v222 = vrot.slane %v193, %v221
    %v223 = vmul.f32 %v94, %v222
    %v224 = vadd.f32 %v218, %v223
    %v225 = vlaneseq
    %v226 = vshrl.u32 %v225, 7
    %v227 = vsub.s32 0, %v226
    %v228 = vrot.slane %v185, %v227
    %v229 = vmul.f32 %v104, %v228
    %v230 = vadd.f32 %v224, %v229
    %v231 = vlaneseq
    %v232 = vshrl.u32 %v231, 7
    %v233 = vsub.s32 1, %v232
    %v234 = vrot.slane %v185, %v233
    %v235 = vmul.f32 %v114, %v234
    %v236 = vadd.f32 %v230, %v235
    %v237 = vlaneseq
    %v238 = vshrl.u32 %v237, 7
    %v239 = vsub.s32 2, %v238
    %v240 = vrot.slane %v185, %v239
    %v241 = vmul.f32 %v124, %v240
    %v242 = vadd.f32 %v236, %v241
    %v243 = vlaneseq
    %v244 = vshrl.u32 %v243, 7
    %v245 = vsub.s32 3, %v244
    %v246 = vrot.slane %v185, %v245
    %v247 = vmul.f32 %v134, %v246
    %v248 = vadd.f32 %v242, %v247
    %v249 = vlaneseq
    %v250 = vshrl.u32 %v249, 7
    %v251 = vsub.s32 0, %v250
    %v252 = vrot.slane %v200, %v251
    %v253 = vmul.f32 %v144, %v252
    %v254 = vadd.f32 %v248, %v253
    %v255 = vlaneseq
    %v256 = vshrl.u32 %v255, 7
    %v257 = vsub.s32 1, %v256
    %v258 = vrot.slane %v200, %v257
    %v259 = vmul.f32 %v154, %v258
    %v260 = vadd.f32 %v254, %v259
    %v261 = vlaneseq
    %v262 = vshrl.u32 %v261, 7
    %v263 = vsub.s32 2, %v262
    %v264 = vrot.slane %v200, %v263
    %v265 = vmul.f32 %v164, %v264
    %v266 = vadd.f32 %v260, %v265
    %v267 = vlaneseq
    %v268 = vshrl.u32 %v267, 7
    %v269 = vsub.s32 3, %v268
    %v270 = vrot.slane %v200, %v269
    %v271 = vmul.f32 %v174, %v270
    %v272 = vadd.f32 %v266, %v271
    %s273 = scalar_lea.vmem [#allocation7], 8
    %274 = vst.msk [vmem:[%s273] sm:$0xff] %vm182, %v272
    // Predicated region
    $region18: #{tpu_custom_call.1} parent=1 // pred_check
      _
    $region19: #{tpu_custom_call.1} parent=1 // pred_check_branch
      %276 = sbr.rel (0) target = $region21
    $region20: #{tpu_custom_call.1} parent=1 // pred_region
      %s278 = ssub.s32 256, 256
      %279 = vsyncadd [#allocation4], %s278
      %s280 = sshll.u32 [#allocation7], 4
      %s281 = int_to_ptr.vmem [resolvable:$true] %s280
      %286 = dma.vmem_to_hbm [thread:$0]  %s281, 256, %s2, [#allocation4], 128, 128, 8
    $region21: #{tpu_custom_call.1} parent=1 // pred_fallthru
      _
    // Predicated region
    $region22: #{tpu_custom_call.1} parent=1 // pred_check
      _
    $region23: #{tpu_custom_call.1} parent=1 // pred_check_branch
      %288 = sbr.rel (0) target = $region25
    $region24: #{tpu_custom_call.1} parent=1 // pred_region
      %289 = dma.done [#allocation4], 256
    $region25: #{tpu_custom_call.1} parent=1 // pred_fallthru
      _
    %290 = vsyncpa [#allocation3], 1
    %291 = vsyncpa [#allocation6], 1
    %292 = vsyncpa [#allocation4], 1

</llo_original>
